<compile_context>
chip_gen: v7x
topology: tpu7x:2x2x1
jax: 0.10.0
libtpu: 0.0.40
codegen_flags: <defaults>
</compile_context>

<pallas_src>
import functools
import math

import jax
import jax.numpy as jnp
from jax.experimental import pallas as pl
from jax.experimental.pallas import tpu as pltpu


# ----------------------------------------------------------------------------- utils
def _round_up(x, m):
    return (x + m - 1) // m * m


def _tile(dim, cap, align):
    d = _round_up(dim, align)
    return d if d <= cap else cap


class KeyGen:
    def __init__(self, key):
        self.key = key

    def __call__(self):
        self.key, sub = jax.random.split(self.key)
        return sub


# ----------------------------------------------------------------------------- Pallas kernels
def _mm_bn_act_kernel(x_ref, w_ref, s_ref, b_ref, o_ref, acc_ref, *, relu):
    # y = act( (x @ w) * scale + bias ), accumulated over the K grid axis.
    @pl.when(pl.program_id(2) == 0)
    def _init():
        acc_ref[...] = jnp.zeros_like(acc_ref)

    acc_ref[...] += jnp.dot(x_ref[...], w_ref[...],
                            preferred_element_type=jnp.float32)

    @pl.when(pl.program_id(2) == pl.num_programs(2) - 1)
    def _epilogue():
        y = acc_ref[...] * s_ref[...] + b_ref[...]
        if relu:
            y = jnp.maximum(y, 0.0)
        o_ref[...] = y


def _mm_bn_act_res_kernel(x_ref, w_ref, s_ref, b_ref, r_ref, o_ref, acc_ref, *, relu):
    # Same as above, plus a fused residual add in the epilogue.
    @pl.when(pl.program_id(2) == 0)
    def _init():
        acc_ref[...] = jnp.zeros_like(acc_ref)

    acc_ref[...] += jnp.dot(x_ref[...], w_ref[...],
                            preferred_element_type=jnp.float32)

    @pl.when(pl.program_id(2) == pl.num_programs(2) - 1)
    def _epilogue():
        y = acc_ref[...] * s_ref[...] + b_ref[...] + r_ref[...]
        if relu:
            y = jnp.maximum(y, 0.0)
        o_ref[...] = y


def _maxpool9_kernel(x_ref, o_ref):
    # x_ref: (9, tm, C) -> elementwise max over the 9 window taps.
    m = x_ref[0]
    for i in range(1, 9):
        m = jnp.maximum(m, x_ref[i])
    o_ref[...] = m


# ----------------------------------------------------------------------------- Pallas wrappers
@functools.partial(jax.jit, static_argnames=("relu",))
def matmul_scale_bias_act(x, w, scale, bias, relu, residual=None):
    """Tiled fused GEMM + BN affine + (residual) + (ReLU) on the MXU.

    x: (M, K) f32, w: (K, N) f32, scale/bias: (N,) f32, residual: (M, N) f32
    or None.  x/w are fed to the MXU as bf16 with f32 accumulation; the
    scale/bias/residual epilogue runs in f32 on the k==last grid step only.
    """
    M, K = x.shape
    _, N = w.shape

    # Tile sizes: adapt to small layers, cap so VMEM stays a few MiB.
    tm = _tile(M, 256, 16)
    tn = _tile(N, 256, 128)
    tk = _tile(K, 512, 128)
    Mp, Kp, Np = _round_up(M, tm), _round_up(K, tk), _round_up(N, tn)

    # TODO(synk): fold ragged-edge padding into the kernel (masked stores)
    #             instead of jnp.pad / slice around every call.
    xp = jnp.pad(x.astype(jnp.bfloat16), ((0, Mp - M), (0, Kp - K)))
    wp = jnp.pad(w.astype(jnp.bfloat16), ((0, Kp - K), (0, Np - N)))
    sp = jnp.pad(scale.astype(jnp.float32).reshape(1, -1), ((0, 0), (0, Np - N)))
    bp = jnp.pad(bias.astype(jnp.float32).reshape(1, -1), ((0, 0), (0, Np - N)))

    grid = (Mp // tm, Np // tn, Kp // tk)
    x_spec = pl.BlockSpec((tm, tk), lambda i, j, k: (i, k))
    w_spec = pl.BlockSpec((tk, tn), lambda i, j, k: (k, j))
    v_spec = pl.BlockSpec((1, tn), lambda i, j, k: (0, j))
    o_spec = pl.BlockSpec((tm, tn), lambda i, j, k: (i, j))

    if residual is None:
        kernel = functools.partial(_mm_bn_act_kernel, relu=relu)
        in_specs = [x_spec, w_spec, v_spec, v_spec]
        args = (xp, wp, sp, bp)
    else:
        rp = jnp.pad(residual.astype(jnp.float32), ((0, Mp - M), (0, Np - N)))
        kernel = functools.partial(_mm_bn_act_res_kernel, relu=relu)
        in_specs = [x_spec, w_spec, v_spec, v_spec,
                    pl.BlockSpec((tm, tn), lambda i, j, k: (i, j))]
        args = (xp, wp, sp, bp, rp)

    out = pl.pallas_call(
        kernel,
        out_shape=jax.ShapeDtypeStruct((Mp, Np), jnp.float32),
        grid=grid,
        in_specs=in_specs,
        out_specs=o_spec,
        scratch_shapes=[pltpu.VMEM((tm, tn), jnp.float32)],
        compiler_params=pltpu.CompilerParams(
            dimension_semantics=("parallel", "parallel", "arbitrary")),
    )(*args)
    return out[:M, :N]


@jax.jit
def maxpool_3x3_s2_p1(x):
    """nn.MaxPool2d(kernel_size=3, stride=2, padding=1) on NHWC input."""
    N, H, W, C = x.shape
    k, s, p = 3, 2, 1
    Ho = (H + 2 * p - k) // s + 1
    Wo = (W + 2 * p - k) // s + 1
    neg_inf = jnp.float32(-jnp.inf)
    xp = jnp.pad(x, ((0, 0), (p, p), (p, p), (0, 0)), constant_values=neg_inf)
    taps = [xp[:, i:i + s * Ho:s, j:j + s * Wo:s, :] for i in range(k) for j in range(k)]
    patches = jnp.stack(taps, axis=0).reshape(9, N * Ho * Wo, C)

    M = N * Ho * Wo
    tm = _tile(M, 512, 8)
    Mp, Cp = _round_up(M, tm), _round_up(C, 128)
    patches = jnp.pad(patches, ((0, 0), (0, Mp - M), (0, Cp - C)),
                      constant_values=neg_inf)

    out = pl.pallas_call(
        _maxpool9_kernel,
        out_shape=jax.ShapeDtypeStruct((Mp, Cp), jnp.float32),
        grid=(Mp // tm,),
        in_specs=[pl.BlockSpec((9, tm, Cp), lambda i: (0, i, 0))],
        out_specs=pl.BlockSpec((tm, Cp), lambda i: (i, 0)),
        compiler_params=pltpu.CompilerParams(
            dimension_semantics=("parallel",)),
    )(patches)
    return out[:M, :C].reshape(N, Ho, Wo, C)


# ----------------------------------------------------------------------------- conv / bottleneck glue
def _im2col(x, k, stride, pad):
    # x: (N, H, W, C) -> (N, Ho, Wo, k*k*C), tap order (ki, kj, C)
    # TODO(synk): fold the 9-tap loop into the GEMM K grid axis instead of
    #             materializing the im2col blow-up in HBM for 3x3 convs.
    N, H, W, C = x.shape
    Ho = (H + 2 * pad - k) // stride + 1
    Wo = (W + 2 * pad - k) // stride + 1
    xp = jnp.pad(x, ((0, 0), (pad, pad), (pad, pad), (0, 0)))
    cols = [xp[:, i:i + stride * Ho:stride, j:j + stride * Wo:stride, :]
            for i in range(k) for j in range(k)]
    return jnp.concatenate(cols, axis=-1), Ho, Wo


def conv_bn(x, p, k, stride, pad, relu, residual=None):
    """Conv2d(bias=True) + BatchNorm2d (eval, folded) + optional residual + ReLU."""
    N, _, _, cin = x.shape
    cols, Ho, Wo = _im2col(x, k, stride, pad)
    xm = cols.reshape(N * Ho * Wo, k * k * cin)
    wm = p["w"].reshape(k * k * cin, -1)           # HWIO weight layout
    scale = p["gamma"] * jax.lax.rsqrt(p["var"] + 1e-5)
    bias = p["beta"] + (p["b"] - p["mean"]) * scale
    y = matmul_scale_bias_act(xm, wm, scale, bias, relu, residual)
    return y.reshape(N, Ho, Wo, -1)


def bottleneck(x, p):
    ds = p["downsample"]
    stride1 = 2 if ds else 1
    if p["shortcut"] is not None:
        sc = conv_bn(x, p["shortcut"], 1, stride1, 0, relu=False)
    else:
        sc = x
    Ns, Hs, Ws, Cs = sc.shape
    sc_flat = sc.reshape(Ns * Hs * Ws, Cs)

    y = conv_bn(x, p["conv1"], 1, stride1, 0, relu=True)
    y = conv_bn(y, p["conv2"], 3, 1, 1, relu=True)
    # conv3 + BN, then "+= shortcut", then ReLU -- all fused in one Pallas call.
    y = conv_bn(y, p["conv3"], 1, 1, 0, relu=True, residual=sc_flat)
    return y


# ----------------------------------------------------------------------------- parameter init
def conv_bn_params(kg, k, cin, cout):
    fan_in = k * k * cin
    return {
        "w": jax.random.normal(kg(), (k, k, cin, cout), jnp.float32) * (0.5 / math.sqrt(fan_in)),
        "b": jax.random.normal(kg(), (cout,), jnp.float32) * 0.01,
        "gamma": 1.0 + 0.01 * jax.random.normal(kg(), (cout,), jnp.float32),
        "beta": 0.01 * jax.random.normal(kg(), (cout,), jnp.float32),
        "mean": 0.01 * jax.random.normal(kg(), (cout,), jnp.float32),
        "var": 1.0 + 0.01 * jax.random.normal(kg(), (cout,), jnp.float32),
    }


def make_bottleneck_params(kg, cin, cout, downsample):
    mid = cout // 4
    p = {"downsample": downsample}
    if downsample or cin != cout:
        p["shortcut"] = conv_bn_params(kg, 1, cin, cout)
    else:
        p["shortcut"] = None
    p["conv1"] = conv_bn_params(kg, 1, cin, mid)
    p["conv2"] = conv_bn_params(kg, 3, mid, mid)
    p["conv3"] = conv_bn_params(kg, 1, mid, cout)
    return p


def init_resnet101_params(key):
    kg = KeyGen(key)
    params = {"stem": conv_bn_params(kg, 7, 3, 64)}

    def make_layer(specs):
        return [make_bottleneck_params(kg, cin, cout, ds) for (cin, cout, ds) in specs]

    params["layer2"] = make_layer([(64, 256, False), (256, 256, False), (256, 256, False)])
    params["layer3"] = make_layer([(256, 512, True)] + [(512, 512, False)] * 3)
    params["layer4"] = make_layer([(512, 1024, True)] + [(1024, 1024, False)] * 22)
    params["layer5"] = make_layer([(1024, 2048, True)] + [(2048, 2048, False)] * 2)
    params["fc"] = {
        "w": jax.random.normal(kg(), (2048, 1000), jnp.float32) * (1.0 / math.sqrt(2048)),
        "b": jax.random.normal(kg(), (1000,), jnp.float32) * 0.01,
    }
    return params


# ----------------------------------------------------------------------------- forward
def resnet101_forward(params, x_nchw):
    # layout: input NCHW (PyTorch) -> NHWC internally.
    x = jnp.transpose(x_nchw, (0, 2, 3, 1)).astype(jnp.float32)

    # layer1: Conv7x7/s2/p3 + BN + ReLU
    x = conv_bn(x, params["stem"], k=7, stride=2, pad=3, relu=True)

    # layer2: MaxPool3x3/s2/p1 + 3 bottlenecks
    x = maxpool_3x3_s2_p1(x)
    for blk in params["layer2"]:
        x = bottleneck(x, blk)
    for blk in params["layer3"]:
        x = bottleneck(x, blk)
    for blk in params["layer4"]:
        x = bottleneck(x, blk)
    for blk in params["layer5"]:
        x = bottleneck(x, blk)

    # layer6: AdaptiveAvgPool2d((1,1)) + Flatten + Linear(2048, 1000)
    x = jnp.mean(x, axis=(1, 2))                       # (N, 2048)
    ones = jnp.ones((params["fc"]["w"].shape[1],), jnp.float32)
    logits = matmul_scale_bias_act(x, params["fc"]["w"], ones, params["fc"]["b"], relu=False)
    return logits                                      # (N, 1000)


# ----------------------------------------------------------------------------- main
if __name__ == "__main__":
    root = jax.random.PRNGKey(0)
    k_in, k_params = jax.random.split(root)

    x = jax.random.normal(k_in, (2, 3, 16, 16), jnp.float32)   # NCHW like PyTorch
    params = init_resnet101_params(k_params)

    out = resnet101_forward(params, x)
    out = jax.block_until_ready(out)

    assert out.shape == (2, 1000), out.shape
    assert bool(jnp.all(jnp.isfinite(out)))
    print("KERNEL_OK")
</pallas_src>

<mosaic_0001>
module attributes {stable_mosaic.version = 11 : i64} {
  func.func @_mm_bn_act_kernel(%arg0: i32, %arg1: i32, %arg2: i32, %arg3: memref<128x256xbf16, #tpu.memory_space<vmem>>, %arg4: memref<256x128xbf16, #tpu.memory_space<vmem>>, %arg5: memref<1x128xf32, #tpu.memory_space<vmem>>, %arg6: memref<1x128xf32, #tpu.memory_space<vmem>>, %arg7: memref<128x128xf32, #tpu.memory_space<vmem>>, %arg8: memref<128x128xf32, #tpu.memory_space<vmem>>) attributes {dimension_semantics = [#tpu.dimension_semantics<parallel>, #tpu.dimension_semantics<parallel>, #tpu.dimension_semantics<arbitrary>], iteration_bounds = array<i64: 1, 1, 1>, scalar_prefetch = 0 : i64, scratch_operands = 1 : i64, tpu.core_type = #tpu.core_type<tc>, window_params = [{transform_indices = @transform_0, window_bounds = array<i64: 128, 256>}, {transform_indices = @transform_1, window_bounds = array<i64: 256, 128>}, {transform_indices = @transform_2, window_bounds = array<i64: 1, 128>}, {transform_indices = @transform_3, window_bounds = array<i64: 1, 128>}, {transform_indices = @transform_4, window_bounds = array<i64: 128, 128>}]} {
    %c0_i32 = arith.constant 0 : i32
    %0 = arith.cmpi eq, %arg2, %c0_i32 : i32
    %1 = arith.extui %0 : i1 to i32
    %c0_i32_0 = arith.constant 0 : i32
    %2 = arith.cmpi ne, %1, %c0_i32_0 : i32
    scf.if %2 {
      %cst_10 = arith.constant 0.000000e+00 : f32
      %12 = vector.broadcast %cst_10 : f32 to vector<128x128xf32>
      %c0_11 = arith.constant 0 : index
      %c0_12 = arith.constant 0 : index
      %13 = vector.load %arg8[%c0_11, %c0_12] : memref<128x128xf32, #tpu.memory_space<vmem>>, vector<128x128xf32>
      tpu.vector_store %arg8[%c0_11, %c0_12], %12 {strides = array<i32>} : memref<128x128xf32, #tpu.memory_space<vmem>>, vector<128x128xf32>,
    } else {
    }
    %c0 = arith.constant 0 : index
    %c0_1 = arith.constant 0 : index
    %3 = vector.load %arg8[%c0, %c0_1] : memref<128x128xf32, #tpu.memory_space<vmem>>, vector<128x128xf32>
    %c0_2 = arith.constant 0 : index
    %c0_3 = arith.constant 0 : index
    %4 = vector.load %arg3[%c0_2, %c0_3] : memref<128x256xbf16, #tpu.memory_space<vmem>>, vector<128x256xbf16>
    %c0_4 = arith.constant 0 : index
    %c0_5 = arith.constant 0 : index
    %5 = vector.load %arg4[%c0_4, %c0_5] : memref<256x128xbf16, #tpu.memory_space<vmem>>, vector<256x128xbf16>
    %cst = arith.constant dense<0.000000e+00> : vector<128x128xf32>
    %6 = tpu.matmul %4, %5, %cst {dimension_numbers = #tpu.dot_dimension_numbers<[1], [0], [0], [1], [0, 0, 1, 1], [], []>} : vector<128x256xbf16>, vector<256x128xbf16>, vector<128x128xf32> -> vector<128x128xf32>
    %7 = arith.addf %3, %6 : vector<128x128xf32>
    %c0_6 = arith.constant 0 : index
    %c0_7 = arith.constant 0 : index
    %8 = vector.load %arg8[%c0_6, %c0_7] : memref<128x128xf32, #tpu.memory_space<vmem>>, vector<128x128xf32>
    tpu.vector_store %arg8[%c0_6, %c0_7], %7 {strides = array<i32>} : memref<128x128xf32, #tpu.memory_space<vmem>>, vector<128x128xf32>,
    %c0_i32_8 = arith.constant 0 : i32
    %9 = arith.cmpi eq, %arg2, %c0_i32_8 : i32
    %10 = arith.extui %9 : i1 to i32
    %c0_i32_9 = arith.constant 0 : i32
    %11 = arith.cmpi ne, %10, %c0_i32_9 : i32
    scf.if %11 {
      %c0_10 = arith.constant 0 : index
      %c0_11 = arith.constant 0 : index
      %12 = vector.load %arg8[%c0_10, %c0_11] : memref<128x128xf32, #tpu.memory_space<vmem>>, vector<128x128xf32>
      %c0_12 = arith.constant 0 : index
      %c0_13 = arith.constant 0 : index
      %13 = vector.load %arg5[%c0_12, %c0_13] : memref<1x128xf32, #tpu.memory_space<vmem>>, vector<1x128xf32>
      %14 = vector.broadcast %13 : vector<1x128xf32> to vector<128x128xf32>
      %15 = arith.mulf %12, %14 : vector<128x128xf32>
      %c0_14 = arith.constant 0 : index
      %c0_15 = arith.constant 0 : index
      %16 = vector.load %arg6[%c0_14, %c0_15] : memref<1x128xf32, #tpu.memory_space<vmem>>, vector<1x128xf32>
      %17 = vector.broadcast %16 : vector<1x128xf32> to vector<128x128xf32>
      %18 = arith.addf %15, %17 : vector<128x128xf32>
      %cst_16 = arith.constant 0.000000e+00 : f32
      %19 = vector.broadcast %cst_16 : f32 to vector<128x128xf32>
      %20 = arith.maximumf %18, %19 : vector<128x128xf32>
      %c0_17 = arith.constant 0 : index
      %c0_18 = arith.constant 0 : index
      %21 = vector.load %arg7[%c0_17, %c0_18] : memref<128x128xf32, #tpu.memory_space<vmem>>, vector<128x128xf32>
      tpu.vector_store %arg7[%c0_17, %c0_18], %20 {strides = array<i32>} : memref<128x128xf32, #tpu.memory_space<vmem>>, vector<128x128xf32>,
    } else {
    }
    return
  }
  func.func @transform_0(%arg0: i32, %arg1: i32, %arg2: i32) -> (i32, i32) {
    %c0_i32 = arith.constant 0 : i32
    return %arg0, %arg2 : i32, i32
  }
  func.func @transform_1(%arg0: i32, %arg1: i32, %arg2: i32) -> (i32, i32) {
    %c0_i32 = arith.constant 0 : i32
    return %arg2, %arg1 : i32, i32
  }
  func.func @transform_2(%arg0: i32, %arg1: i32, %arg2: i32) -> (i32, i32) {
    %c0_i32 = arith.constant 0 : i32
    %c0_i32_0 = arith.constant 0 : i32
    return %c0_i32, %arg1 : i32, i32
  }
  func.func @transform_3(%arg0: i32, %arg1: i32, %arg2: i32) -> (i32, i32) {
    %c0_i32 = arith.constant 0 : i32
    %c0_i32_0 = arith.constant 0 : i32
    return %c0_i32, %arg1 : i32, i32
  }
  func.func @transform_4(%arg0: i32, %arg1: i32, %arg2: i32) -> (i32, i32) {
    %c0_i32 = arith.constant 0 : i32
    return %arg0, %arg1 : i32, i32
  }
}

</mosaic_0001>

<llo_original>
// kernel: matmul_scale_bias_act.1
$region0: #{matmul_scale_bias_act.1}
  #allocation0 [shape = 'u32[]', space=smem, size = 0x4, offset = 0x4, fixed_abs, tag = 'smem constant byte address 0x4 - core index']
  #allocation1 [shape = 'u32[144,128]{1,0:T(1,128)}', space=vmem, size = 0x12000, scoped, tag = 'internal scratch']
  #allocation2 [shape = 'f32[128,128]{1,0:T(8,128)}', space=vmem, size = 0x10000, scoped, tag = 'scratch operand']
  %s0 = inlined_call_operand.vmem [shape: bf16[128,256], index: 0, kind: input, shape index: {}]
  %s1 = inlined_call_operand.vmem [shape: bf16[256,128], index: 1, kind: input, shape index: {}]
  %s2 = inlined_call_operand.vmem [shape: f32[1,128], index: 2, kind: input, shape index: {}]
  %s3 = inlined_call_operand.vmem [shape: f32[1,128], index: 3, kind: input, shape index: {}]
  %s4 = inlined_call_operand.vmem [shape: f32[128,128], index: 4, kind: output, shape index: {}]
  %s5 = sld [smem:[#allocation0]]
  $region34: #{matmul_scale_bias_act.1} parent=0
    _
  %s7 = ssub.s32 1, %s5
  %s8 = scalar_select 0, %s7, %s5
  // Predicated region
  $region2: #{matmul_scale_bias_act.1} parent=0 // pred_check
    _
  $region3: #{matmul_scale_bias_act.1} parent=0 // pred_check_branch
    %10 = sbr.rel (0) target = $region5
  $region4: #{matmul_scale_bias_act.1} parent=0 // pred_region
    _
  $region5: #{matmul_scale_bias_act.1} parent=0 // pred_fallthru
    _
  // Predicated region
  $region6: #{matmul_scale_bias_act.1} parent=0 // pred_check
    _
  $region7: #{matmul_scale_bias_act.1} parent=0 // pred_check_branch
    %12 = sbr.rel (0) target = $region9
  $region8: #{matmul_scale_bias_act.1} parent=0 // pred_region
    _
  $region9: #{matmul_scale_bias_act.1} parent=0 // pred_fallthru
    _
  // Predicated region
  $region10: #{matmul_scale_bias_act.1} parent=0 // pred_check
    _
  $region11: #{matmul_scale_bias_act.1} parent=0 // pred_check_branch
    %14 = sbr.rel (0) target = $region13
  $region12: #{matmul_scale_bias_act.1} parent=0 // pred_region
    _
  $region13: #{matmul_scale_bias_act.1} parent=0 // pred_fallthru
    _
  // Predicated region
  $region14: #{matmul_scale_bias_act.1} parent=0 // pred_check
    _
  $region15: #{matmul_scale_bias_act.1} parent=0 // pred_check_branch
    %16 = sbr.rel (0) target = $region17
  $region16: #{matmul_scale_bias_act.1} parent=0 // pred_region
    _
  $region17: #{matmul_scale_bias_act.1} parent=0 // pred_fallthru
    _
  %p18 = scmp.eq.s32.totalorder 0, 0
  // Predicated region
  $region18: #{matmul_scale_bias_act.1} parent=0 // pred_check
    %p19 = pneg %p18
  $region19: #{matmul_scale_bias_act.1} parent=0 // pred_check_branch
    %21 = sbr.rel (%p19) target = $region21
  $region20: #{matmul_scale_bias_act.1} parent=0 // pred_region
    %22 = vst [vmem:[#allocation2] sm:$0xff] 0.0
    %23 = vst [vmem:[#allocation2 + $0x8] sm:$0xff] 0.0
    %24 = vst [vmem:[#allocation2 + $0x10] sm:$0xff] 0.0
    %25 = vst [vmem:[#allocation2 + $0x18] sm:$0xff] 0.0
    %26 = vst [vmem:[#allocation2 + $0x20] sm:$0xff] 0.0
    %27 = vst [vmem:[#allocation2 + $0x28] sm:$0xff] 0.0
    %28 = vst [vmem:[#allocation2 + $0x30] sm:$0xff] 0.0
    %29 = vst [vmem:[#allocation2 + $0x38] sm:$0xff] 0.0
    %30 = vst [vmem:[#allocation2 + $0x40] sm:$0xff] 0.0
    %31 = vst [vmem:[#allocation2 + $0x48] sm:$0xff] 0.0
    %32 = vst [vmem:[#allocation2 + $0x50] sm:$0xff] 0.0
    %33 = vst [vmem:[#allocation2 + $0x58] sm:$0xff] 0.0
    %34 = vst [vmem:[#allocation2 + $0x60] sm:$0xff] 0.0
    %35 = vst [vmem:[#allocation2 + $0x68] sm:$0xff] 0.0
    %36 = vst [vmem:[#allocation2 + $0x70] sm:$0xff] 0.0
    %37 = vst [vmem:[#allocation2 + $0x78] sm:$0xff] 0.0
  $region21: #{matmul_scale_bias_act.1} parent=0 // pred_fallthru
    _
  %v38 = vld [vmem:[#allocation2] sm:$0xff]
  %v39 = vld [vmem:[#allocation2 + $0x8] sm:$0xff]
  %v40 = vld [vmem:[#allocation2 + $0x10] sm:$0xff]
  %v41 = vld [vmem:[#allocation2 + $0x18] sm:$0xff]
  %v42 = vld [vmem:[#allocation2 + $0x20] sm:$0xff]
  %v43 = vld [vmem:[#allocation2 + $0x28] sm:$0xff]
  %v44 = vld [vmem:[#allocation2 + $0x30] sm:$0xff]
  %v45 = vld [vmem:[#allocation2 + $0x38] sm:$0xff]
  %v46 = vld [vmem:[#allocation2 + $0x40] sm:$0xff]
  %v47 = vld [vmem:[#allocation2 + $0x48] sm:$0xff]
  %v48 = vld [vmem:[#allocation2 + $0x50] sm:$0xff]
  %v49 = vld [vmem:[#allocation2 + $0x58] sm:$0xff]
  %v50 = vld [vmem:[#allocation2 + $0x60] sm:$0xff]
  %v51 = vld [vmem:[#allocation2 + $0x68] sm:$0xff]
  %v52 = vld [vmem:[#allocation2 + $0x70] sm:$0xff]
  %v53 = vld [vmem:[#allocation2 + $0x78] sm:$0xff]
  %v54 = vld [vmem:[%s0] sm:$0xff]
  %v55 = vld [vmem:[%s0 + $0x8] sm:$0xff]
  %v56 = vld [vmem:[%s0 + $0x10] sm:$0xff]
  %v57 = vld [vmem:[%s0 + $0x18] sm:$0xff]
  %v58 = vld [vmem:[%s0 + $0x20] sm:$0xff]
  %v59 = vld [vmem:[%s0 + $0x28] sm:$0xff]
  %v60 = vld [vmem:[%s0 + $0x30] sm:$0xff]
  %v61 = vld [vmem:[%s0 + $0x38] sm:$0xff]
  %v62 = vld [vmem:[%s0 + $0x40] sm:$0xff]
  %v63 = vld [vmem:[%s0 + $0x48] sm:$0xff]
  %v64 = vld [vmem:[%s0 + $0x50] sm:$0xff]
  %v65 = vld [vmem:[%s0 + $0x58] sm:$0xff]
  %v66 = vld [vmem:[%s0 + $0x60] sm:$0xff]
  %v67 = vld [vmem:[%s0 + $0x68] sm:$0xff]
  %v68 = vld [vmem:[%s0 + $0x70] sm:$0xff]
  %v69 = vld [vmem:[%s0 + $0x78] sm:$0xff]
  %v70 = vld [vmem:[%s1] sm:$0xf]
  %v71 = vld [vmem:[%s1 + $0x4] sm:$0xf]
  %v72 = vld [vmem:[%s1 + $0x8] sm:$0xf]
  %v73 = vld [vmem:[%s1 + $0xc] sm:$0xf]
  %v74 = vld [vmem:[%s1 + $0x10] sm:$0xf]
  %v75 = vld [vmem:[%s1 + $0x14] sm:$0xf]
  %v76 = vld [vmem:[%s1 + $0x18] sm:$0xf]
  %v77 = vld [vmem:[%s1 + $0x1c] sm:$0xf]
  %v78 = vld [vmem:[%s1 + $0x20] sm:$0xf]
  %v79 = vld [vmem:[%s1 + $0x24] sm:$0xf]
  %v80 = vld [vmem:[%s1 + $0x28] sm:$0xf]
  %v81 = vld [vmem:[%s1 + $0x2c] sm:$0xf]
  %v82 = vld [vmem:[%s1 + $0x30] sm:$0xf]
  %v83 = vld [vmem:[%s1 + $0x34] sm:$0xf]
  %v84 = vld [vmem:[%s1 + $0x38] sm:$0xf]
  %v85 = vld [vmem:[%s1 + $0x3c] sm:$0xf]
  %v86 = vld [vmem:[%s1 + $0x40] sm:$0xf]
  %v87 = vld [vmem:[%s1 + $0x44] sm:$0xf]
  %v88 = vld [vmem:[%s1 + $0x48] sm:$0xf]
  %v89 = vld [vmem:[%s1 + $0x4c] sm:$0xf]
  %v90 = vld [vmem:[%s1 + $0x50] sm:$0xf]
  %v91 = vld [vmem:[%s1 + $0x54] sm:$0xf]
  %v92 = vld [vmem:[%s1 + $0x58] sm:$0xf]
  %v93 = vld [vmem:[%s1 + $0x5c] sm:$0xf]
  %v94 = vld [vmem:[%s1 + $0x60] sm:$0xf]
  %v95 = vld [vmem:[%s1 + $0x64] sm:$0xf]
  %v96 = vld [vmem:[%s1 + $0x68] sm:$0xf]
  %v97 = vld [vmem:[%s1 + $0x6c] sm:$0xf]
  %v98 = vld [vmem:[%s1 + $0x70] sm:$0xf]
  %v99 = vld [vmem:[%s1 + $0x74] sm:$0xf]
  %v100 = vld [vmem:[%s1 + $0x78] sm:$0xf]
  %v101 = vld [vmem:[%s1 + $0x7c] sm:$0xf]
  %v118 = vunpack.c.l.b16 %v54
  %v119 = vunpack.c.h.b16 %v54
  %v120 = vunpack.c.l.b16 %v55
  %v121 = vunpack.c.h.b16 %v55
  %v122 = vunpack.c.l.b16 %v56
  %v123 = vunpack.c.h.b16 %v56
  %v124 = vunpack.c.l.b16 %v57
  %v125 = vunpack.c.h.b16 %v57
  %v126 = vunpack.c.l.b16 %v58
  %v127 = vunpack.c.h.b16 %v58
  %v128 = vunpack.c.l.b16 %v59
  %v129 = vunpack.c.h.b16 %v59
  %v130 = vunpack.c.l.b16 %v60
  %v131 = vunpack.c.h.b16 %v60
  %v132 = vunpack.c.l.b16 %v61
  %v133 = vunpack.c.h.b16 %v61
  %v134 = vunpack.c.l.b16 %v62
  %v135 = vunpack.c.h.b16 %v62
  %v136 = vunpack.c.l.b16 %v63
  %v137 = vunpack.c.h.b16 %v63
  %v138 = vunpack.c.l.b16 %v64
  %v139 = vunpack.c.h.b16 %v64
  %v140 = vunpack.c.l.b16 %v65
  %v141 = vunpack.c.h.b16 %v65
  %v142 = vunpack.c.l.b16 %v66
  %v143 = vunpack.c.h.b16 %v66
  %v144 = vunpack.c.l.b16 %v67
  %v145 = vunpack.c.h.b16 %v67
  %v146 = vunpack.c.l.b16 %v68
  %v147 = vunpack.c.h.b16 %v68
  %v148 = vunpack.c.l.b16 %v69
  %v149 = vunpack.c.h.b16 %v69
  %v150 = vpack.c.b16 %v120, %v118
  %v151 = vpack.c.b16 %v121, %v119
  %v152 = vpack.c.b16 %v124, %v122
  %v153 = vpack.c.b16 %v125, %v123
  %v154 = vpack.c.b16 %v128, %v126
  %v155 = vpack.c.b16 %v129, %v127
  %v156 = vpack.c.b16 %v132, %v130
  %v157 = vpack.c.b16 %v133, %v131
  %v158 = vpack.c.b16 %v136, %v134
  %v159 = vpack.c.b16 %v137, %v135
  %v160 = vpack.c.b16 %v140, %v138
  %v161 = vpack.c.b16 %v141, %v139
  %v162 = vpack.c.b16 %v144, %v142
  %v163 = vpack.c.b16 %v145, %v143
  %v164 = vpack.c.b16 %v148, %v146
  %v165 = vpack.c.b16 %v149, %v147
  %v214 = vunpack.c.l.b16 %v70
  %v215 = vunpack.c.l.b16 %v71
  %v216 = vunpack.c.l.b16 %v72
  %v217 = vunpack.c.l.b16 %v73
  %v218 = vunpack.c.l.b16 %v74
  %v219 = vunpack.c.l.b16 %v75
  %v220 = vunpack.c.l.b16 %v76
  %v221 = vunpack.c.l.b16 %v77
  %v222 = vunpack.c.l.b16 %v78
  %v223 = vunpack.c.l.b16 %v79
  %v224 = vunpack.c.l.b16 %v80
  %v225 = vunpack.c.l.b16 %v81
  %v226 = vunpack.c.l.b16 %v82
  %v227 = vunpack.c.l.b16 %v83
  %v228 = vunpack.c.l.b16 %v84
  %v229 = vunpack.c.l.b16 %v85
  %v230 = vunpack.c.l.b16 %v86
  %v231 = vunpack.c.l.b16 %v87
  %v232 = vunpack.c.l.b16 %v88
  %v233 = vunpack.c.l.b16 %v89
  %v234 = vunpack.c.l.b16 %v90
  %v235 = vunpack.c.l.b16 %v91
  %v236 = vunpack.c.l.b16 %v92
  %v237 = vunpack.c.l.b16 %v93
  %v238 = vunpack.c.l.b16 %v94
  %v239 = vunpack.c.l.b16 %v95
  %v240 = vunpack.c.l.b16 %v96
  %v241 = vunpack.c.l.b16 %v97
  %v242 = vunpack.c.l.b16 %v98
  %v243 = vunpack.c.l.b16 %v99
  %v244 = vunpack.c.l.b16 %v100
  %v245 = vunpack.c.l.b16 %v101
  %v246 = vpack.c.b16 %v215, %v214
  %v247 = vpack.c.b16 %v217, %v216
  %v248 = vpack.c.b16 %v219, %v218
  %v249 = vpack.c.b16 %v221, %v220
  %v250 = vpack.c.b16 %v223, %v222
  %v251 = vpack.c.b16 %v225, %v224
  %v252 = vpack.c.b16 %v227, %v226
  %v253 = vpack.c.b16 %v229, %v228
  %v254 = vpack.c.b16 %v231, %v230
  %v255 = vpack.c.b16 %v233, %v232
  %v256 = vpack.c.b16 %v235, %v234
  %v257 = vpack.c.b16 %v237, %v236
  %v258 = vpack.c.b16 %v239, %v238
  %v259 = vpack.c.b16 %v241, %v240
  %v260 = vpack.c.b16 %v243, %v242
  %v261 = vpack.c.b16 %v245, %v244
  %278 = vmatprep.subr.bf16.mxu0 0
  %279 = vmatpush1.bf16.msra.mxu0 %v246
  %280 = vmatprep.subr.bf16.mxu0 0
  %281 = vmatpush1.bf16.msra.mxu0 %v247
  %282 = vmatprep.subr.bf16.mxu0 0
  %283 = vmatpush1.bf16.msra.mxu0 %v248
  %284 = vmatprep.subr.bf16.mxu0 0
  %285 = vmatpush1.bf16.msra.mxu0 %v249
  %286 = vmatprep.subr.bf16.mxu0 0
  %287 = vmatpush1.bf16.msra.mxu0 %v250
  %288 = vmatprep.subr.bf16.mxu0 0
  %289 = vmatpush1.bf16.msra.mxu0 %v251
  %290 = vmatprep.subr.bf16.mxu0 0
  %291 = vmatpush1.bf16.msra.mxu0 %v252
  %292 = vmatprep.subr.bf16.mxu0 0
  %293 = vmatpush1.bf16.msra.mxu0 %v253
  %294 = vmatprep.subr.bf16.mxu0 0
  %295 = vmatpush1.bf16.msra.mxu0 %v254
  %296 = vmatprep.subr.bf16.mxu0 0
  %297 = vmatpush1.bf16.msra.mxu0 %v255
  %298 = vmatprep.subr.bf16.mxu0 0
  %299 = vmatpush1.bf16.msra.mxu0 %v256
  %300 = vmatprep.subr.bf16.mxu0 0
  %301 = vmatpush1.bf16.msra.mxu0 %v257
  %302 = vmatprep.subr.bf16.mxu0 0
  %303 = vmatpush1.bf16.msra.mxu0 %v258
  %304 = vmatprep.subr.bf16.mxu0 0
  %305 = vmatpush1.bf16.msra.mxu0 %v259
  %306 = vmatprep.subr.bf16.mxu0 0
  %307 = vmatpush1.bf16.msra.mxu0 %v260
  %308 = vmatprep.subr.bf16.mxu0 0
  %309 = vmatpush1.bf16.msra.mxu0 %v261
  %310 = vmatprep.mubr.bf16.mxu0 %v151
  %311 = vmatmul.mubr.bf16.gmra.mrb[0].mxu0 %v150
  %v312 = vpop.f32.mrb[0].mxu0
  %v313 = vadd.f32 0.0, %v312
  %v314 = vpop.f32.mrb[0].mxu0
  %v315 = vpop.f32.mrb[0].mxu0
  %v316 = vadd.f32 0.0, %v315
  %v317 = vpop.f32.mrb[0].mxu0
  %318 = vmatprep.mubr.bf16.mxu0 %v153
  %319 = vmatmul.mubr.bf16.gmra.mrb[0].mxu0 %v152
  %v320 = vpop.f32.mrb[0].mxu0
  %v321 = vadd.f32 0.0, %v320
  %v322 = vpop.f32.mrb[0].mxu0
  %v323 = vpop.f32.mrb[0].mxu0
  %v324 = vadd.f32 0.0, %v323
  %v325 = vpop.f32.mrb[0].mxu0
  %326 = vmatprep.mubr.bf16.mxu0 %v155
  %327 = vmatmul.mubr.bf16.gmra.mrb[0].mxu0 %v154
  %v328 = vpop.f32.mrb[0].mxu0
  %v329 = vadd.f32 0.0, %v328
  %v330 = vpop.f32.mrb[0].mxu0
  %v331 = vpop.f32.mrb[0].mxu0
  %v332 = vadd.f32 0.0, %v331
  %v333 = vpop.f32.mrb[0].mxu0
  %334 = vmatprep.mubr.bf16.mxu0 %v157
  %335 = vmatmul.mubr.bf16.gmra.mrb[0].mxu0 %v156
  %v336 = vpop.f32.mrb[0].mxu0
  %v337 = vadd.f32 0.0, %v336
  %v338 = vpop.f32.mrb[0].mxu0
  %v339 = vpop.f32.mrb[0].mxu0
  %v340 = vadd.f32 0.0, %v339
  %v341 = vpop.f32.mrb[0].mxu0
  %342 = vmatprep.mubr.bf16.mxu0 %v159
  %343 = vmatmul.mubr.bf16.gmra.mrb[0].mxu0 %v158
  %v344 = vpop.f32.mrb[0].mxu0
  %v345 = vadd.f32 0.0, %v344
  %v346 = vpop.f32.mrb[0].mxu0
  %v347 = vpop.f32.mrb[0].mxu0
  %v348 = vadd.f32 0.0, %v347
  %v349 = vpop.f32.mrb[0].mxu0
  %350 = vmatprep.mubr.bf16.mxu0 %v161
  %351 = vmatmul.mubr.bf16.gmra.mrb[0].mxu0 %v160
  %v352 = vpop.f32.mrb[0].mxu0
  %v353 = vadd.f32 0.0, %v352
  %v354 = vpop.f32.mrb[0].mxu0
  %v355 = vpop.f32.mrb[0].mxu0
  %v356 = vadd.f32 0.0, %v355
  %v357 = vpop.f32.mrb[0].mxu0
  %358 = vmatprep.mubr.bf16.mxu0 %v163
  %359 = vmatmul.mubr.bf16.gmra.mrb[0].mxu0 %v162
  %v360 = vpop.f32.mrb[0].mxu0
  %v361 = vadd.f32 0.0, %v360
  %v362 = vpop.f32.mrb[0].mxu0
  %v363 = vpop.f32.mrb[0].mxu0
  %v364 = vadd.f32 0.0, %v363
  %v365 = vpop.f32.mrb[0].mxu0
  %366 = vmatprep.mubr.bf16.mxu0 %v165
  %367 = vmatmul.mubr.bf16.gmra.mrb[0].mxu0 %v164
  %v368 = vpop.f32.mrb[0].mxu0
  %v369 = vadd.f32 0.0, %v368
  %v370 = vpop.f32.mrb[0].mxu0
  %v371 = vpop.f32.mrb[0].mxu0
  %v372 = vadd.f32 0.0, %v371
  %v373 = vpop.f32.mrb[0].mxu0
  %374 = vdwg.mxu0
  %v375 = vadd.f32 %v38, %v313
  %v376 = vadd.f32 %v39, %v316
  %v377 = vadd.f32 %v40, %v321
  %v378 = vadd.f32 %v41, %v324
  %v379 = vadd.f32 %v42, %v329
  %v380 = vadd.f32 %v43, %v332
  %v381 = vadd.f32 %v44, %v337
  %v382 = vadd.f32 %v45, %v340
  %v383 = vadd.f32 %v46, %v345
  %v384 = vadd.f32 %v47, %v348
  %v385 = vadd.f32 %v48, %v353
  %v386 = vadd.f32 %v49, %v356
  %v387 = vadd.f32 %v50, %v361
  %v388 = vadd.f32 %v51, %v364
  %v389 = vadd.f32 %v52, %v369
  %v390 = vadd.f32 %v53, %v372
  %391 = vst [vmem:[#allocation2] sm:$0xff] %v375
  %392 = vst [vmem:[#allocation2 + $0x8] sm:$0xff] %v376
  %393 = vst [vmem:[#allocation2 + $0x10] sm:$0xff] %v377
  %394 = vst [vmem:[#allocation2 + $0x18] sm:$0xff] %v378
  %395 = vst [vmem:[#allocation2 + $0x20] sm:$0xff] %v379
  %396 = vst [vmem:[#allocation2 + $0x28] sm:$0xff] %v380
  %397 = vst [vmem:[#allocation2 + $0x30] sm:$0xff] %v381
  %398 = vst [vmem:[#allocation2 + $0x38] sm:$0xff] %v382
  %399 = vst [vmem:[#allocation2 + $0x40] sm:$0xff] %v383
  %400 = vst [vmem:[#allocation2 + $0x48] sm:$0xff] %v384
  %401 = vst [vmem:[#allocation2 + $0x50] sm:$0xff] %v385
  %402 = vst [vmem:[#allocation2 + $0x58] sm:$0xff] %v386
  %403 = vst [vmem:[#allocation2 + $0x60] sm:$0xff] %v387
  %404 = vst [vmem:[#allocation2 + $0x68] sm:$0xff] %v388
  %405 = vst [vmem:[#allocation2 + $0x70] sm:$0xff] %v389
  %406 = vst [vmem:[#allocation2 + $0x78] sm:$0xff] %v390
  // Predicated region
  $region22: #{matmul_scale_bias_act.1} parent=0 // pred_check
    %p407 = pneg %p18
  $region23: #{matmul_scale_bias_act.1} parent=0 // pred_check_branch
    %409 = sbr.rel (%p407) target = $region25
  $region24: #{matmul_scale_bias_act.1} parent=0 // pred_region
    %v410 = vld [vmem:[#allocation2] sm:$0xff]
    %v411 = vld [vmem:[#allocation2 + $0x8] sm:$0xff]
    %v412 = vld [vmem:[#allocation2 + $0x10] sm:$0xff]
    %v413 = vld [vmem:[#allocation2 + $0x18] sm:$0xff]
    %v414 = vld [vmem:[#allocation2 + $0x20] sm:$0xff]
    %v415 = vld [vmem:[#allocation2 + $0x28] sm:$0xff]
    %v416 = vld [vmem:[#allocation2 + $0x30] sm:$0xff]
    %v417 = vld [vmem:[#allocation2 + $0x38] sm:$0xff]
    %v418 = vld [vmem:[#allocation2 + $0x40] sm:$0xff]
    %v419 = vld [vmem:[#allocation2 + $0x48] sm:$0xff]
    %v420 = vld [vmem:[#allocation2 + $0x50] sm:$0xff]
    %v421 = vld [vmem:[#allocation2 + $0x58] sm:$0xff]
    %v422 = vld [vmem:[#allocation2 + $0x60] sm:$0xff]
    %v423 = vld [vmem:[#allocation2 + $0x68] sm:$0xff]
    %v424 = vld [vmem:[#allocation2 + $0x70] sm:$0xff]
    %v425 = vld [vmem:[#allocation2 + $0x78] sm:$0xff]
    %v426 = vld [vmem:[%s2] sm:$0x1]
    %v428 = vlaneseq
    %v429 = vshrl.u32 %v428, 7
    %v430 = vsub.s32 0, %v429
    %v431 = vrot.slane %v426, %v430
    %v433 = vmul.f32 %v410, %v431
    %v434 = vmul.f32 %v411, %v431
    %v435 = vmul.f32 %v412, %v431
    %v436 = vmul.f32 %v413, %v431
    %v437 = vmul.f32 %v414, %v431
    %v438 = vmul.f32 %v415, %v431
    %v439 = vmul.f32 %v416, %v431
    %v440 = vmul.f32 %v417, %v431
    %v441 = vmul.f32 %v418, %v431
    %v442 = vmul.f32 %v419, %v431
    %v443 = vmul.f32 %v420, %v431
    %v444 = vmul.f32 %v421, %v431
    %v445 = vmul.f32 %v422, %v431
    %v446 = vmul.f32 %v423, %v431
    %v447 = vmul.f32 %v424, %v431
    %v448 = vmul.f32 %v425, %v431
    %v449 = vld [vmem:[%s3] sm:$0x1]
    %v451 = vlaneseq
    %v452 = vshrl.u32 %v451, 7
    %v453 = vsub.s32 0, %v452
    %v454 = vrot.slane %v449, %v453
    %v456 = vadd.f32 %v433, %v454
    %v457 = vadd.f32 %v434, %v454
    %v458 = vadd.f32 %v435, %v454
    %v459 = vadd.f32 %v436, %v454
    %v460 = vadd.f32 %v437, %v454
    %v461 = vadd.f32 %v438, %v454
    %v462 = vadd.f32 %v439, %v454
    %v463 = vadd.f32 %v440, %v454
    %v464 = vadd.f32 %v441, %v454
    %v465 = vadd.f32 %v442, %v454
    %v466 = vadd.f32 %v443, %v454
    %v467 = vadd.f32 %v444, %v454
    %v468 = vadd.f32 %v445, %v454
    %v469 = vadd.f32 %v446, %v454
    %v470 = vadd.f32 %v447, %v454
    %v471 = vadd.f32 %v448, %v454
    %v472 = vmax.f32 %v456, 0.0
    %v473 = vmax.f32 %v457, 0.0
    %v474 = vmax.f32 %v458, 0.0
    %v475 = vmax.f32 %v459, 0.0
    %v476 = vmax.f32 %v460, 0.0
    %v477 = vmax.f32 %v461, 0.0
    %v478 = vmax.f32 %v462, 0.0
    %v479 = vmax.f32 %v463, 0.0
    %v480 = vmax.f32 %v464, 0.0
    %v481 = vmax.f32 %v465, 0.0
    %v482 = vmax.f32 %v466, 0.0
    %v483 = vmax.f32 %v467, 0.0
    %v484 = vmax.f32 %v468, 0.0
    %v485 = vmax.f32 %v469, 0.0
    %v486 = vmax.f32 %v470, 0.0
    %v487 = vmax.f32 %v471, 0.0
    %488 = vst [vmem:[%s4] sm:$0xff] %v472
    %489 = vst [vmem:[%s4 + $0x8] sm:$0xff] %v473
    %490 = vst [vmem:[%s4 + $0x10] sm:$0xff] %v474
    %491 = vst [vmem:[%s4 + $0x18] sm:$0xff] %v475
    %492 = vst [vmem:[%s4 + $0x20] sm:$0xff] %v476
    %493 = vst [vmem:[%s4 + $0x28] sm:$0xff] %v477
    %494 = vst [vmem:[%s4 + $0x30] sm:$0xff] %v478
    %495 = vst [vmem:[%s4 + $0x38] sm:$0xff] %v479
    %496 = vst [vmem:[%s4 + $0x40] sm:$0xff] %v480
    %497 = vst [vmem:[%s4 + $0x48] sm:$0xff] %v481
    %498 = vst [vmem:[%s4 + $0x50] sm:$0xff] %v482
    %499 = vst [vmem:[%s4 + $0x58] sm:$0xff] %v483
    %500 = vst [vmem:[%s4 + $0x60] sm:$0xff] %v484
    %501 = vst [vmem:[%s4 + $0x68] sm:$0xff] %v485
    %502 = vst [vmem:[%s4 + $0x70] sm:$0xff] %v486
    %503 = vst [vmem:[%s4 + $0x78] sm:$0xff] %v487
  $region25: #{matmul_scale_bias_act.1} parent=0 // pred_fallthru
    _
  // Predicated region
  $region26: #{matmul_scale_bias_act.1} parent=0 // pred_check
    _
  $region27: #{matmul_scale_bias_act.1} parent=0 // pred_check_branch
    %505 = sbr.rel (0) target = $region29
  $region28: #{matmul_scale_bias_act.1} parent=0 // pred_region
    _
  $region29: #{matmul_scale_bias_act.1} parent=0 // pred_fallthru
    _
  // Predicated region
  $region30: #{matmul_scale_bias_act.1} parent=0 // pred_check
    _
  $region31: #{matmul_scale_bias_act.1} parent=0 // pred_check_branch
    %507 = sbr.rel (0) target = $region33
  $region32: #{matmul_scale_bias_act.1} parent=0 // pred_region
    _
  $region33: #{matmul_scale_bias_act.1} parent=0 // pred_fallthru
    _

</llo_original>
